<compile_context>
chip_gen: v6e
topology: v6e:2x2x1
jax: 0.10.0
libtpu: 0.0.40
codegen_flags: <defaults>
</compile_context>

<pallas_src>
import numpy as np
import jax
import jax.numpy as jnp
from jax.experimental import pallas as pl
from jax.experimental.pallas import tpu as pltpu

# ----------------------------- model constants -----------------------------
NUM_BODY_JOINTS = 23
NUM_JOINTS = NUM_BODY_JOINTS + 1          # 24 (incl. root)
NUM_BETAS = 10
NUM_POSE_BASIS = NUM_BODY_JOINTS * 9      # 207
NUM_FEATS = NUM_BETAS + NUM_POSE_BASIS    # 217
LANE = 128

# Standard SMPL kinematic tree (parents[0] = -1)
SMPL_PARENTS = np.array(
    [-1, 0, 0, 0, 1, 2, 3, 4, 5, 6, 7, 8, 9, 9, 9, 12, 13, 14, 16, 17, 18, 19, 20, 21],
    dtype=np.int32)


# ----------------------------- Pallas kernel ------------------------------
def _skin_kernel(lhs_ref, at_ref, bsd_ref, vtemp_ref, wt_ref, out_ref):
    """Per vertex tile: fused blendshapes + lane-dense LBS + transform apply.

    lhs_ref  : (G8, KFP)      bf16  replicated [betas | pose_feature | 0] rows (row 3b+i)
    at_ref   : (4*G8, J)      f32   grouped transform coeffs (x/y/z/transl groups)
    bsd_ref  : (3, KFP, TV)   bf16  fused shape+pose blendshape basis per coordinate
    vtemp_ref: (3, 1, TV)     f32   template vertices per coordinate
    wt_ref   : (J, TV)        f32   lbs_weights^T
    out_ref  : (G8, TV)       f32   row 3b+i = vertex coordinate i of batch b
    """
    G8 = out_ref.shape[0]

    # Blended per-vertex transform coefficients, grouped & 8-sublane aligned:
    # t_all[g*G8 + 3b+i, v] = sum_j A[b, j, i, g] * W[v, j]
    t_all = jnp.dot(at_ref[...], wt_ref[...], preferred_element_type=jnp.float32)

    # Posed vertex coordinates, already replicated in the output row layout (row 3b+i).
    lhs = lhs_ref[...]
    x = jnp.dot(lhs, bsd_ref[0], preferred_element_type=jnp.float32) + vtemp_ref[0]
    y = jnp.dot(lhs, bsd_ref[1], preferred_element_type=jnp.float32) + vtemp_ref[1]
    z = jnp.dot(lhs, bsd_ref[2], preferred_element_type=jnp.float32) + vtemp_ref[2]

    # Whole-tile FMAs + one unmasked block store (no per-row extracts / masked stores).
    out_ref[...] = (t_all[0:G8] * x + t_all[G8:2 * G8] * y
                    + t_all[2 * G8:3 * G8] * z + t_all[3 * G8:4 * G8])


def skin_call(lhs_rep, a_grouped, bsd_k, vtemp_k, w_t, tile_v):
    G8, KFP = lhs_rep.shape
    J, Vp = w_t.shape
    grid = (Vp // tile_v,)
    return pl.pallas_call(
        _skin_kernel,
        out_shape=jax.ShapeDtypeStruct((G8, Vp), jnp.float32),
        grid_spec=pltpu.PrefetchScalarGridSpec(
            num_scalar_prefetch=0,
            grid=grid,
            in_specs=[
                pl.BlockSpec((G8, KFP), lambda v: (0, 0)),
                pl.BlockSpec((4 * G8, J), lambda v: (0, 0)),
                pl.BlockSpec((3, KFP, tile_v), lambda v: (0, 0, v)),
                pl.BlockSpec((3, 1, tile_v), lambda v: (0, 0, v)),
                pl.BlockSpec((J, tile_v), lambda v: (0, v)),
            ],
            out_specs=pl.BlockSpec((G8, tile_v), lambda v: (0, v)),
        ),
        # V-tiles are independent -> shard across v7x's 2 TensorCores; harmless on v5e/v6e.
        compiler_params=pltpu.CompilerParams(dimension_semantics=("parallel",)),
    )(lhs_rep, a_grouped, bsd_k, vtemp_k, w_t)


# --------------------------- small JAX glue ops -----------------------------
def batch_rodrigues(rot_vecs, eps=1e-8):
    N = rot_vecs.shape[0]
    dtype = rot_vecs.dtype
    angle = jnp.linalg.norm(rot_vecs + eps, axis=1, keepdims=True)      # (N, 1)
    rot_dir = rot_vecs / angle
    cos = jnp.cos(angle)[:, None, :]                                    # (N, 1, 1)
    sin = jnp.sin(angle)[:, None, :]
    rx, ry, rz = rot_dir[:, 0], rot_dir[:, 1], rot_dir[:, 2]
    zeros = jnp.zeros_like(rx)
    K = jnp.stack([zeros, -rz, ry, rz, zeros, -rx, -ry, rx, zeros],
                  axis=1).reshape(N, 3, 3)
    ident = jnp.eye(3, dtype=dtype)[None]
    return ident + sin * K + (1 - cos) * jnp.matmul(K, K)


def transform_mat(R, t):
    N = R.shape[0]
    top = jnp.concatenate([R, t], axis=2)                               # (N, 3, 4)
    bottom = jnp.tile(jnp.array([[[0., 0., 0., 1.]]], dtype=R.dtype), (N, 1, 1))
    return jnp.concatenate([top, bottom], axis=1)                       # (N, 4, 4)


def batch_rigid_transform(rot_mats, joints, parents):
    # TODO(synk): the 24-step kinematic-chain recursion is inherently sequential and
    # tiny (24 x 4x4 matmuls); it stays in plain JAX instead of a Pallas kernel.
    B, J = joints.shape[:2]
    dtype = joints.dtype
    joints_u = joints[..., None]                                        # (B, J, 3, 1)
    rel = joints_u.at[:, 1:].set(joints_u[:, 1:] - joints_u[:, parents[1:]])
    tmats = transform_mat(rot_mats.reshape(-1, 3, 3),
                          rel.reshape(-1, 3, 1)).reshape(B, J, 4, 4)
    chain = [tmats[:, 0]]
    for i in range(1, J):
        chain.append(jnp.matmul(chain[int(parents[i])], tmats[:, i]))
    transforms = jnp.stack(chain, axis=1)                               # (B, J, 4, 4)
    posed_joints = transforms[:, :, :3, 3]
    jh = jnp.concatenate([joints_u, jnp.zeros((B, J, 1, 1), dtype)], axis=2)
    tj = jnp.matmul(transforms, jh)                                     # (B, J, 4, 1)
    rel_transforms = transforms - jnp.pad(tj, ((0, 0), (0, 0), (0, 0), (3, 0)))
    return posed_joints, rel_transforms


# --------------------------- SMPL model construction ------------------------
def _pad_and_tile(num_verts):
    """Pad V to a lane-aligned size admitting a wide vertex tile; at real SMPL size this
    gives an EVEN 1024-wide tile count so v7x's two TensorCores stay balanced."""
    if num_verts <= 1024:
        vp = max(LANE, ((num_verts + LANE - 1) // LANE) * LANE)
        return vp, vp
    vp = ((num_verts + 1023) // 1024) * 1024
    if (vp // 1024) % 2 == 1:
        vp += 1024
    return vp, 1024


def build_smpl_model(key, num_verts=128, dtype=jnp.float32):
    """Deterministic synthetic SMPL parameters (shapes follow the real model)."""
    ks = jax.random.split(key, 6)
    V, J = num_verts, NUM_JOINTS
    v_template = jax.random.normal(ks[0], (V, 3), dtype)
    shapedirs = jax.random.normal(ks[1], (V, 3, NUM_BETAS), dtype) * 0.03
    posedirs_raw = jax.random.normal(ks[2], (V, 3, NUM_POSE_BASIS), dtype) * 0.01
    J_regressor = jax.nn.softmax(jax.random.normal(ks[3], (J, V), dtype), axis=1)
    lbs_weights = jax.nn.softmax(2.0 * jax.random.normal(ks[4], (V, J), dtype), axis=1)
    # TODO(synk): real VertexJointSelector uses fixed SMPL-H vertex ids (nose, ears,
    # finger/toe tips); synthetic deterministic indices are used here instead.
    extra_idxs = np.array([3, 17, 33, 61, 77, 91, 105, 120], dtype=np.int32) % V

    # ---- precomputed rest-joint regression (exact linear contraction, all f32) -------
    joints_template = jnp.dot(J_regressor, v_template, precision='highest')   # (J, 3)
    joints_shape = jnp.einsum('jv,vkl->jkl', J_regressor, shapedirs,
                              precision='highest')                            # (J, 3, 10)
    joints_shape_mat = joints_shape.transpose(2, 0, 1).reshape(NUM_BETAS, J * 3)

    # ---- pad V up to the tiling-friendly size (zero padding; sliced off at the end) ---
    Vp, tile_v = _pad_and_tile(V)
    pad = Vp - V
    v_template_p = jnp.pad(v_template, ((0, pad), (0, 0)))
    shapedirs_p = jnp.pad(shapedirs, ((0, pad), (0, 0), (0, 0)))
    posedirs_p = jnp.pad(posedirs_raw, ((0, pad), (0, 0), (0, 0)))
    lbs_weights_p = jnp.pad(lbs_weights, ((0, pad), (0, 0)))

    # Fused blendshape basis, coordinate-leading, lane-dense, bf16 (memory-bound path):
    # bsd_k[k, c, v] = shapedirs[v,k,c] for c<10, posedirs[v,k,c-10] for 10<=c<217, else 0.
    KFP = ((NUM_FEATS + 15) // 16) * 16                                  # 224 (bf16 aligned)
    bsd = jnp.concatenate([shapedirs_p, posedirs_p], axis=2)             # (Vp, 3, 217)
    bsd = jnp.pad(bsd, ((0, 0), (0, 0), (0, KFP - NUM_FEATS)))
    bsd_k = bsd.transpose(1, 2, 0).astype(jnp.bfloat16)                  # (3, KFP, Vp)

    model = dict(
        # --- reference-layout (unpadded, PyTorch-equivalent) parameters ------------
        v_template=v_template,
        shapedirs=shapedirs,
        J_regressor=J_regressor,
        lbs_weights=lbs_weights,
        parents=SMPL_PARENTS,
        extra_idxs=extra_idxs,
        posedirs_rowmajor=posedirs_raw.reshape(3 * V, NUM_POSE_BASIS).T,   # (207, 3V)
        # --- kernel-layout / precomputed parameters --------------------------------
        num_verts=V,
        num_verts_pad=Vp,
        tile_v=tile_v,
        kfp=KFP,
        joints_template=joints_template,                                   # (J, 3) f32
        joints_shape_mat=joints_shape_mat,                                 # (10, 3J) f32
        bsd_k=bsd_k,                                                       # (3, KFP, Vp) bf16
        vtemp_k=v_template_p.T.reshape(3, 1, Vp),                          # (3, 1, Vp) f32
        w_t=lbs_weights_p.T,                                               # (J, Vp) f32
    )
    return model


# --------------------------- SMPL forward (Pallas) --------------------------
def smpl_forward_pallas(model, betas, body_pose, global_orient, transl):
    B = betas.shape[0]
    V = model["num_verts"]
    J = NUM_JOINTS
    G8 = ((3 * B + 7) // 8) * 8
    full_pose = jnp.concatenate([global_orient, body_pose], axis=1)     # (B, 72)

    # ---- rest-pose joints via precomputed contraction (tiny plain-JAX f32 matmul) ----
    joints_rest = (model["joints_template"][None]
                   + jnp.dot(betas, model["joints_shape_mat"],
                             precision='highest').reshape(B, J, 3))     # (B, J, 3)

    # ---- tiny glue: Rodrigues + kinematic chain ----
    rot_mats = batch_rodrigues(full_pose.reshape(-1, 3)).reshape(B, J, 3, 3)
    pose_feature = (rot_mats[:, 1:] - jnp.eye(3, dtype=rot_mats.dtype)
                    ).reshape(B, NUM_POSE_BASIS)
    joints_posed, A = batch_rigid_transform(rot_mats, joints_rest, model["parents"])

    # Grouped, trimmed (only the 3 used transform rows), 8-sublane-padded coefficients:
    #   a_grouped[g*G8 + 3b+i, j] = A[b, j, i, g]   g=0..2: x/y/z coeff, g=3: translation
    a_coeffs = jnp.transpose(A[:, :, :3, :], (3, 0, 2, 1)).reshape(4, 3 * B, J)
    a_grouped = jnp.pad(a_coeffs, ((0, 0), (0, G8 - 3 * B), (0, 0))).reshape(4 * G8, J)

    # Replicated blendshape LHS: row 3b+i = [betas_b | pose_feature_b | 0-pad]
    feats = jnp.concatenate([betas, pose_feature], axis=1)              # (B, 217)
    feats = jnp.pad(feats, ((0, 0), (0, model["kfp"] - feats.shape[1])))
    lhs_rep = jnp.pad(jnp.repeat(feats, 3, axis=0),
                      ((0, G8 - 3 * B), (0, 0))).astype(jnp.bfloat16)   # (G8, KFP)

    # ---- Pallas kernel (V-tiled grid): fused blendshapes + lane-dense LBS + apply ----
    verts_rows = skin_call(lhs_rep, a_grouped, model["bsd_k"], model["vtemp_k"],
                           model["w_t"], model["tile_v"])               # (G8, Vp)
    vertices = verts_rows[:3 * B].reshape(B, 3, -1).transpose(0, 2, 1)[:, :V, :]

    # vertex_joint_selector: append selected extra vertices to the joints
    joints = jnp.concatenate([joints_posed, vertices[:, model["extra_idxs"]]], axis=1)

    # apply translation
    vertices = vertices + transl[:, None, :]
    joints = joints + transl[:, None, :]
    return vertices, joints, full_pose


# --------------------------- pure-JAX reference ------------------------------
def lbs_reference(betas, pose, v_template, shapedirs, posedirs_mat,
                  J_regressor, parents, lbs_weights):
    B = betas.shape[0]
    V = v_template.shape[0]
    dtype = betas.dtype
    blend = jnp.einsum('bl,vkl->bvk', betas, shapedirs, precision='highest')
    v_shaped = v_template[None] + blend
    joints = jnp.einsum('jv,bvk->bjk', J_regressor, v_shaped, precision='highest')
    rot_mats = batch_rodrigues(pose.reshape(-1, 3)).reshape(B, -1, 3, 3)
    pose_feature = (rot_mats[:, 1:] - jnp.eye(3, dtype=dtype)).reshape(B, -1)
    pose_offsets = jnp.matmul(pose_feature, posedirs_mat,
                              precision='highest').reshape(B, V, 3)
    v_posed = pose_offsets + v_shaped
    joints_posed, A = batch_rigid_transform(rot_mats, joints, parents)
    T = jnp.einsum('vj,bjpq->bvpq', lbs_weights, A, precision='highest')
    homo = jnp.concatenate([v_posed, jnp.ones((B, V, 1), dtype)], axis=2)
    verts = jnp.einsum('bvij,bvj->bvi', T, homo, precision='highest')[:, :, :3]
    return verts, joints_posed


def smpl_forward_reference(model, betas, body_pose, global_orient, transl):
    full_pose = jnp.concatenate([global_orient, body_pose], axis=1)
    verts, joints_posed = lbs_reference(
        betas, full_pose, model["v_template"], model["shapedirs"],
        model["posedirs_rowmajor"], model["J_regressor"], model["parents"],
        model["lbs_weights"])
    joints = jnp.concatenate([joints_posed, verts[:, model["extra_idxs"]]], axis=1)
    verts = verts + transl[:, None, :]
    joints = joints + transl[:, None, :]
    return verts, joints, full_pose


# ----------------------------------- main ------------------------------------
if __name__ == "__main__":
    key = jax.random.PRNGKey(0)
    k_model, k_b, k_go, k_bp, k_t = jax.random.split(key, 5)

    B, V = 2, 128
    model = build_smpl_model(k_model, num_verts=V)

    betas = jax.random.normal(k_b, (B, NUM_BETAS), jnp.float32)
    global_orient = 0.5 * jax.random.normal(k_go, (B, 3), jnp.float32)
    body_pose = 0.3 * jax.random.normal(k_bp, (B, NUM_BODY_JOINTS * 3), jnp.float32)
    transl = 0.1 * jax.random.normal(k_t, (B, 3), jnp.float32)

    verts, joints, full_pose = smpl_forward_pallas(
        model, betas, body_pose, global_orient, transl)
    jax.block_until_ready((verts, joints, full_pose))

    verts_ref, joints_ref, _ = smpl_forward_reference(
        model, betas, body_pose, global_orient, transl)

    assert verts.shape == (B, V, 3)
    assert joints.shape == (B, NUM_JOINTS + model["extra_idxs"].shape[0], 3)
    np.testing.assert_allclose(np.asarray(verts), np.asarray(verts_ref),
                               atol=2e-3, rtol=2e-3)
    np.testing.assert_allclose(np.asarray(joints), np.asarray(joints_ref),
                               atol=2e-3, rtol=2e-3)
    print("KERNEL_OK")
</pallas_src>

<mosaic_0001>
module attributes {stable_mosaic.version = 11 : i64} {
  func.func @_skin_kernel(%arg0: i32, %arg1: memref<8x224xbf16, #tpu.memory_space<vmem>>, %arg2: memref<32x24xf32, #tpu.memory_space<vmem>>, %arg3: memref<3x224x128xbf16, #tpu.memory_space<vmem>>, %arg4: memref<3x1x128xf32, #tpu.memory_space<vmem>>, %arg5: memref<24x128xf32, #tpu.memory_space<vmem>>, %arg6: memref<8x128xf32, #tpu.memory_space<vmem>>) attributes {dimension_semantics = [#tpu.dimension_semantics<parallel>], iteration_bounds = array<i64: 1>, scalar_prefetch = 0 : i64, scratch_operands = 0 : i64, tpu.core_type = #tpu.core_type<tc>, window_params = [{pipeline_mode = #tpu.pipeline_mode<synchronous>, transform_indices = @transform_0, window_bounds = array<i64: 8, 224>}, {pipeline_mode = #tpu.pipeline_mode<synchronous>, transform_indices = @transform_1, window_bounds = array<i64: 32, 24>}, {transform_indices = @transform_2, window_bounds = array<i64: 3, 224, 128>}, {transform_indices = @transform_3, window_bounds = array<i64: 3, 1, 128>}, {transform_indices = @transform_4, window_bounds = array<i64: 24, 128>}, {transform_indices = @transform_5, window_bounds = array<i64: 8, 128>}]} {
    %c0 = arith.constant 0 : index
    %c0_0 = arith.constant 0 : index
    %0 = vector.load %arg2[%c0, %c0_0] : memref<32x24xf32, #tpu.memory_space<vmem>>, vector<32x24xf32>
    %c0_1 = arith.constant 0 : index
    %c0_2 = arith.constant 0 : index
    %1 = vector.load %arg5[%c0_1, %c0_2] : memref<24x128xf32, #tpu.memory_space<vmem>>, vector<24x128xf32>
    %cst = arith.constant dense<0.000000e+00> : vector<32x128xf32>
    %2 = tpu.matmul %0, %1, %cst {dimension_numbers = #tpu.dot_dimension_numbers<[1], [0], [0], [1], [0, 0, 1, 1], [], []>} : vector<32x24xf32>, vector<24x128xf32>, vector<32x128xf32> -> vector<32x128xf32>
    %c0_3 = arith.constant 0 : index
    %c0_4 = arith.constant 0 : index
    %3 = vector.load %arg1[%c0_3, %c0_4] : memref<8x224xbf16, #tpu.memory_space<vmem>>, vector<8x224xbf16>
    %c0_5 = arith.constant 0 : index
    %c0_6 = arith.constant 0 : index
    %c0_7 = arith.constant 0 : index
    %4 = vector.load %arg3[%c0_5, %c0_6, %c0_7] : memref<3x224x128xbf16, #tpu.memory_space<vmem>>, vector<1x224x128xbf16>
    %5 = vector.shape_cast %4 : vector<1x224x128xbf16> to vector<224x128xbf16>
    %cst_8 = arith.constant dense<0.000000e+00> : vector<8x128xf32>
    %6 = tpu.matmul %3, %5, %cst_8 {dimension_numbers = #tpu.dot_dimension_numbers<[1], [0], [0], [1], [0, 0, 1, 1], [], []>} : vector<8x224xbf16>, vector<224x128xbf16>, vector<8x128xf32> -> vector<8x128xf32>
    %c0_9 = arith.constant 0 : index
    %c0_10 = arith.constant 0 : index
    %c0_11 = arith.constant 0 : index
    %7 = vector.load %arg4[%c0_9, %c0_10, %c0_11] : memref<3x1x128xf32, #tpu.memory_space<vmem>>, vector<1x1x128xf32>
    %8 = vector.shape_cast %7 : vector<1x1x128xf32> to vector<1x128xf32>
    %9 = vector.broadcast %8 : vector<1x128xf32> to vector<8x128xf32>
    %10 = arith.addf %6, %9 : vector<8x128xf32>
    %c1 = arith.constant 1 : index
    %c0_12 = arith.constant 0 : index
    %c0_13 = arith.constant 0 : index
    %11 = vector.load %arg3[%c1, %c0_12, %c0_13] : memref<3x224x128xbf16, #tpu.memory_space<vmem>>, vector<1x224x128xbf16>
    %12 = vector.shape_cast %11 : vector<1x224x128xbf16> to vector<224x128xbf16>
    %cst_14 = arith.constant dense<0.000000e+00> : vector<8x128xf32>
    %13 = tpu.matmul %3, %12, %cst_14 {dimension_numbers = #tpu.dot_dimension_numbers<[1], [0], [0], [1], [0, 0, 1, 1], [], []>} : vector<8x224xbf16>, vector<224x128xbf16>, vector<8x128xf32> -> vector<8x128xf32>
    %c1_15 = arith.constant 1 : index
    %c0_16 = arith.constant 0 : index
    %c0_17 = arith.constant 0 : index
    %14 = vector.load %arg4[%c1_15, %c0_16, %c0_17] : memref<3x1x128xf32, #tpu.memory_space<vmem>>, vector<1x1x128xf32>
    %15 = vector.shape_cast %14 : vector<1x1x128xf32> to vector<1x128xf32>
    %16 = vector.broadcast %15 : vector<1x128xf32> to vector<8x128xf32>
    %17 = arith.addf %13, %16 : vector<8x128xf32>
    %c2 = arith.constant 2 : index
    %c0_18 = arith.constant 0 : index
    %c0_19 = arith.constant 0 : index
    %18 = vector.load %arg3[%c2, %c0_18, %c0_19] : memref<3x224x128xbf16, #tpu.memory_space<vmem>>, vector<1x224x128xbf16>
    %19 = vector.shape_cast %18 : vector<1x224x128xbf16> to vector<224x128xbf16>
    %cst_20 = arith.constant dense<0.000000e+00> : vector<8x128xf32>
    %20 = tpu.matmul %3, %19, %cst_20 {dimension_numbers = #tpu.dot_dimension_numbers<[1], [0], [0], [1], [0, 0, 1, 1], [], []>} : vector<8x224xbf16>, vector<224x128xbf16>, vector<8x128xf32> -> vector<8x128xf32>
    %c2_21 = arith.constant 2 : index
    %c0_22 = arith.constant 0 : index
    %c0_23 = arith.constant 0 : index
    %21 = vector.load %arg4[%c2_21, %c0_22, %c0_23] : memref<3x1x128xf32, #tpu.memory_space<vmem>>, vector<1x1x128xf32>
    %22 = vector.shape_cast %21 : vector<1x1x128xf32> to vector<1x128xf32>
    %23 = vector.broadcast %22 : vector<1x128xf32> to vector<8x128xf32>
    %24 = arith.addf %20, %23 : vector<8x128xf32>
    %25 = vector.extract_strided_slice %2 {offsets = [0, 0], sizes = [8, 128], strides = [1, 1]} : vector<32x128xf32> to vector<8x128xf32>
    %26 = arith.mulf %25, %10 : vector<8x128xf32>
    %27 = vector.extract_strided_slice %2 {offsets = [8, 0], sizes = [8, 128], strides = [1, 1]} : vector<32x128xf32> to vector<8x128xf32>
    %28 = arith.mulf %27, %17 : vector<8x128xf32>
    %29 = arith.addf %26, %28 : vector<8x128xf32>
    %30 = vector.extract_strided_slice %2 {offsets = [16, 0], sizes = [8, 128], strides = [1, 1]} : vector<32x128xf32> to vector<8x128xf32>
    %31 = arith.mulf %30, %24 : vector<8x128xf32>
    %32 = arith.addf %29, %31 : vector<8x128xf32>
    %33 = vector.extract_strided_slice %2 {offsets = [24, 0], sizes = [8, 128], strides = [1, 1]} : vector<32x128xf32> to vector<8x128xf32>
    %34 = arith.addf %32, %33 : vector<8x128xf32>
    %c0_24 = arith.constant 0 : index
    %c0_25 = arith.constant 0 : index
    %35 = vector.load %arg6[%c0_24, %c0_25] : memref<8x128xf32, #tpu.memory_space<vmem>>, vector<8x128xf32>
    tpu.vector_store %arg6[%c0_24, %c0_25], %34 {strides = array<i32>} : memref<8x128xf32, #tpu.memory_space<vmem>>, vector<8x128xf32>,
    return
  }
  func.func @transform_0(%arg0: i32) -> (i32, i32) {
    %c0_i32 = arith.constant 0 : i32
    %c0_i32_0 = arith.constant 0 : i32
    %c0_i32_1 = arith.constant 0 : i32
    return %c0_i32, %c0_i32_0 : i32, i32
  }
  func.func @transform_1(%arg0: i32) -> (i32, i32) {
    %c0_i32 = arith.constant 0 : i32
    %c0_i32_0 = arith.constant 0 : i32
    %c0_i32_1 = arith.constant 0 : i32
    return %c0_i32, %c0_i32_0 : i32, i32
  }
  func.func @transform_2(%arg0: i32) -> (i32, i32, i32) {
    %c0_i32 = arith.constant 0 : i32
    %c0_i32_0 = arith.constant 0 : i32
    %c0_i32_1 = arith.constant 0 : i32
    return %c0_i32, %c0_i32_0, %arg0 : i32, i32, i32
  }
  func.func @transform_3(%arg0: i32) -> (i32, i32, i32) {
    %c0_i32 = arith.constant 0 : i32
    %c0_i32_0 = arith.constant 0 : i32
    %c0_i32_1 = arith.constant 0 : i32
    return %c0_i32, %c0_i32_0, %arg0 : i32, i32, i32
  }
  func.func @transform_4(%arg0: i32) -> (i32, i32) {
    %c0_i32 = arith.constant 0 : i32
    %c0_i32_0 = arith.constant 0 : i32
    return %c0_i32, %arg0 : i32, i32
  }
  func.func @transform_5(%arg0: i32) -> (i32, i32) {
    %c0_i32 = arith.constant 0 : i32
    %c0_i32_0 = arith.constant 0 : i32
    return %c0_i32, %arg0 : i32, i32
  }
}

</mosaic_0001>

<llo_original>
// kernel: tpu_custom_call.1
$region0: #{tpu_custom_call.1}
  #allocation0 [shape = 'u32[]', space=smem, size = 0x4, offset = 0x4, fixed_abs, tag = 'smem constant byte address 0x4 - core index']
  #allocation1 [shape = 'u32[144,128]{1,0:T(1,128)}', space=vmem, size = 0x12000, scoped, tag = 'internal scratch']
  %s0 = inlined_call_operand.vmem [shape: bf16[8,224], index: 0, kind: input, shape index: {}]
  %s1 = inlined_call_operand.vmem [shape: f32[32,24], index: 1, kind: input, shape index: {}]
  %s2 = inlined_call_operand.hbm [shape: bf16[3,224,128], index: 2, kind: input, shape index: {}]
  %s3 = inlined_call_operand.vmem [shape: f32[3,1,128], index: 3, kind: input, shape index: {}]
  %s4 = inlined_call_operand.vmem [shape: f32[24,128], index: 4, kind: input, shape index: {}]
  %s5 = inlined_call_operand.hbm [shape: f32[8,128], index: 5, kind: output, shape index: {}]
  %s6 = sld [smem:[#allocation0]]
  $region34: #{tpu_custom_call.1} parent=0
    _
  %s8 = ssub.s32 1, %s6
  %s9 = scalar_select 0, %s8, %s6
  $region1: #{tpu_custom_call.1} parent=0
    #allocation2 [shape = 'u8[172032]{0}', space=vmem, size = 0x2a000, scoped, tag = 'input window, operand 2, single buffered']
    #allocation3 [shape = 's32[1]{0}', space=sflag, size = 0x4, scoped, tag = 'scoped memory for tpu_custom_call.1']
    #allocation4 [shape = 's32[1]{0}', space=sflag, size = 0x4, scoped, tag = 'scoped memory for tpu_custom_call.1']
    #allocation5 [shape = 'u8[4096]{0}', space=vmem, size = 0x1000, scoped, tag = 'output window, operand 0, single buffered']
    %10 = vsyncpa [#allocation3], 0
    %11 = vsyncpa [#allocation4], 0
    // Predicated region
    $region2: #{tpu_custom_call.1} parent=1 // pred_check
      _
    $region3: #{tpu_custom_call.1} parent=1 // pred_check_branch
      %13 = sbr.rel (0) target = $region5
    $region4: #{tpu_custom_call.1} parent=1 // pred_region
      _
    $region5: #{tpu_custom_call.1} parent=1 // pred_fallthru
      _
    // Predicated region
    $region6: #{tpu_custom_call.1} parent=1 // pred_check
      _
    $region7: #{tpu_custom_call.1} parent=1 // pred_check_branch
      %15 = sbr.rel (0) target = $region9
    $region8: #{tpu_custom_call.1} parent=1 // pred_region
      _
    $region9: #{tpu_custom_call.1} parent=1 // pred_fallthru
      _
    // Predicated region
    $region10: #{tpu_custom_call.1} parent=1 // pred_check
      _
    $region11: #{tpu_custom_call.1} parent=1 // pred_check_branch
      %17 = sbr.rel (0) target = $region13
    $region12: #{tpu_custom_call.1} parent=1 // pred_region
      %s19 = ssub.s32 5376, 5376
      %20 = vsyncadd [#allocation3], %s19
      %s21 = sshll.u32 [#allocation2], 4
      %s22 = int_to_ptr.vmem [resolvable:$true] %s21
      %27 = dma.hbm_to_vmem [thread:$0]  %s2, 5376, %s22, [#allocation3], 64, 64, 4
    $region13: #{tpu_custom_call.1} parent=1 // pred_fallthru
      _
    // Predicated region
    $region14: #{tpu_custom_call.1} parent=1 // pred_check
      _
    $region15: #{tpu_custom_call.1} parent=1 // pred_check_branch
      %29 = sbr.rel (0) target = $region17
    $region16: #{tpu_custom_call.1} parent=1 // pred_region
      _
    $region17: #{tpu_custom_call.1} parent=1 // pred_fallthru
      _
    // Predicated region
    $region18: #{tpu_custom_call.1} parent=1 // pred_check
      _
    $region19: #{tpu_custom_call.1} parent=1 // pred_check_branch
      %31 = sbr.rel (0) target = $region21
    $region20: #{tpu_custom_call.1} parent=1 // pred_region
      _
    $region21: #{tpu_custom_call.1} parent=1 // pred_fallthru
      _
    // Predicated region
    $region22: #{tpu_custom_call.1} parent=1 // pred_check
      _
    $region23: #{tpu_custom_call.1} parent=1 // pred_check_branch
      %33 = sbr.rel (0) target = $region25
    $region24: #{tpu_custom_call.1} parent=1 // pred_region
      %34 = dma.done [#allocation3], 5376
    $region25: #{tpu_custom_call.1} parent=1 // pred_fallthru
      _
    %v36 = vld [vmem:[%s1] sm:$0xff]
    %v37 = vld [vmem:[%s1 + $0x8] sm:$0xff]
    %v38 = vld [vmem:[%s1 + $0x10] sm:$0xff]
    %v39 = vld [vmem:[%s1 + $0x18] sm:$0xff]
    %v40 = vld [vmem:[%s4] sm:$0xff]
    %v41 = vld [vmem:[%s4 + $0x8] sm:$0xff]
    %v42 = vld [vmem:[%s4 + $0x10] sm:$0xff]
    %vm43 = vcmask 195584
    %v45 = vsel %vm43, %v36, 0
    %v48 = vsel %vm43, %v37, 0
    %v51 = vsel %vm43, %v38, 0
    %v54 = vsel %vm43, %v39, 0
    %56 = vmatprep.subr.mxu0 0.0
    %57 = vmatpush1.msra.mxu0 0.0
    %58 = vmatprep.subr.mxu0 0.0
    %59 = vmatpush1.msra.mxu0 0.0
    %60 = vmatprep.subr.mxu0 0.0
    %61 = vmatpush1.msra.mxu0 0.0
    %62 = vmatprep.subr.mxu0 0.0
    %63 = vmatpush1.msra.mxu0 0.0
    %64 = vmatprep.subr.mxu0 0.0
    %65 = vmatpush1.msra.mxu0 0.0
    %66 = vmatprep.subr.mxu0 0.0
    %67 = vmatpush1.msra.mxu0 0.0
    %68 = vmatprep.subr.mxu0 0.0
    %69 = vmatpush1.msra.mxu0 0.0
    %70 = vmatprep.subr.mxu0 0.0
    %71 = vmatpush1.msra.mxu0 0.0
    %72 = vmatprep.subr.mxu0 0.0
    %73 = vmatpush1.msra.mxu0 0.0
    %74 = vmatprep.subr.mxu0 0.0
    %75 = vmatpush1.msra.mxu0 0.0
    %76 = vmatprep.subr.mxu0 0.0
    %77 = vmatpush1.msra.mxu0 0.0
    %78 = vmatprep.subr.mxu0 0.0
    %79 = vmatpush1.msra.mxu0 0.0
    %80 = vmatprep.subr.mxu0 0.0
    %81 = vmatpush1.msra.mxu0 0.0
    %82 = vmatprep.subr.mxu0 0.0
    %83 = vmatpush1.msra.mxu0 %v42
    %84 = vmatprep.subr.mxu0 0.0
    %85 = vmatpush1.msra.mxu0 %v41
    %86 = vmatprep.subr.mxu0 0.0
    %87 = vmatpush1.msra.mxu0 %v40
    %88 = vmatprep.subr.mxu0 0.0
    %89 = vmatpush2.msra.mxu0 0.0
    %90 = vmatprep.subr.mxu0 0.0
    %91 = vmatpush2.msra.mxu0 0.0
    %92 = vmatprep.subr.mxu0 0.0
    %93 = vmatpush2.msra.mxu0 0.0
    %94 = vmatprep.subr.mxu0 0.0
    %95 = vmatpush2.msra.mxu0 0.0
    %96 = vmatprep.subr.mxu0 0.0
    %97 = vmatpush2.msra.mxu0 0.0
    %98 = vmatprep.subr.mxu0 0.0
    %99 = vmatpush2.msra.mxu0 0.0
    %100 = vmatprep.subr.mxu0 0.0
    %101 = vmatpush2.msra.mxu0 0.0
    %102 = vmatprep.subr.mxu0 0.0
    %103 = vmatpush2.msra.mxu0 0.0
    %104 = vmatprep.subr.mxu0 0.0
    %105 = vmatpush2.msra.mxu0 0.0
    %106 = vmatprep.subr.mxu0 0.0
    %107 = vmatpush2.msra.mxu0 0.0
    %108 = vmatprep.subr.mxu0 0.0
    %109 = vmatpush2.msra.mxu0 0.0
    %110 = vmatprep.subr.mxu0 0.0
    %111 = vmatpush2.msra.mxu0 0.0
    %112 = vmatprep.subr.mxu0 0.0
    %113 = vmatpush2.msra.mxu0 0.0
    %114 = vmatprep.subr.mxu0 0.0
    %115 = vmatpush2.msra.mxu0 0.0
    %116 = vmatprep.subr.mxu0 0.0
    %117 = vmatpush2.msra.mxu0 0.0
    %118 = vmatprep.subr.mxu0 0.0
    %119 = vmatpush2.msra.mxu0 0.0
    %120 = vmatprep.mubr.f32.mxu0 0.0
    %121 = vmatmul.mubr.f32.gmra.mxu0 %v45
    %v122 = vpop.f32.mrf.mxu0
    %v123 = vadd.f32 0.0, %v122
    %v124 = vpop.f32.mrf.mxu0
    %125 = vmatprep.mubr.f32.mxu0 0.0
    %126 = vmatmul.mubr.f32.gmra.mxu0 %v48
    %v127 = vpop.f32.mrf.mxu0
    %v128 = vadd.f32 0.0, %v127
    %v129 = vpop.f32.mrf.mxu0
    %130 = vmatprep.mubr.f32.mxu0 0.0
    %131 = vmatmul.mubr.f32.gmra.mxu0 %v51
    %v132 = vpop.f32.mrf.mxu0
    %v133 = vadd.f32 0.0, %v132
    %v134 = vpop.f32.mrf.mxu0
    %135 = vmatprep.mubr.f32.mxu0 0.0
    %136 = vmatmul.mubr.f32.gmra.mxu0 %v54
    %v137 = vpop.f32.mrf.mxu0
    %v138 = vadd.f32 0.0, %v137
    %v139 = vpop.f32.mrf.mxu0
    %140 = vdwg.mxu0
    %v141 = vld [vmem:[%s0] sm:$0xff]
    %v142 = vld [vmem:[#allocation2] sm:$0xf]
    %v143 = vld [vmem:[#allocation2 + $0x4] sm:$0xf]
    %v144 = vld [vmem:[#allocation2 + $0x8] sm:$0xf]
    %v145 = vld [vmem:[#allocation2 + $0xc] sm:$0xf]
    %v146 = vld [vmem:[#allocation2 + $0x10] sm:$0xf]
    %v147 = vld [vmem:[#allocation2 + $0x14] sm:$0xf]
    %v148 = vld [vmem:[#allocation2 + $0x18] sm:$0xf]
    %v149 = vld [vmem:[#allocation2 + $0x1c] sm:$0xf]
    %v150 = vld [vmem:[#allocation2 + $0x20] sm:$0xf]
    %v151 = vld [vmem:[#allocation2 + $0x24] sm:$0xf]
    %v152 = vld [vmem:[#allocation2 + $0x28] sm:$0xf]
    %v153 = vld [vmem:[#allocation2 + $0x2c] sm:$0xf]
    %v154 = vld [vmem:[#allocation2 + $0x30] sm:$0xf]
    %v155 = vld [vmem:[#allocation2 + $0x34] sm:$0xf]
    %v156 = vld [vmem:[#allocation2 + $0x38] sm:$0xf]
    %v157 = vld [vmem:[#allocation2 + $0x3c] sm:$0xf]
    %v158 = vld [vmem:[#allocation2 + $0x40] sm:$0xf]
    %v159 = vld [vmem:[#allocation2 + $0x44] sm:$0xf]
    %v160 = vld [vmem:[#allocation2 + $0x48] sm:$0xf]
    %v161 = vld [vmem:[#allocation2 + $0x4c] sm:$0xf]
    %v162 = vld [vmem:[#allocation2 + $0x50] sm:$0xf]
    %v163 = vld [vmem:[#allocation2 + $0x54] sm:$0xf]
    %v164 = vld [vmem:[#allocation2 + $0x58] sm:$0xf]
    %v165 = vld [vmem:[#allocation2 + $0x5c] sm:$0xf]
    %v166 = vld [vmem:[#allocation2 + $0x60] sm:$0xf]
    %v167 = vld [vmem:[#allocation2 + $0x64] sm:$0xf]
    %v168 = vld [vmem:[#allocation2 + $0x68] sm:$0xf]
    %v169 = vld [vmem:[#allocation2 + $0x6c] sm:$0xf]
    %v170 = vld [vmem:[%s3] sm:$0x1]
    %v172 = vlaneseq
    %v173 = vshrl.u32 %v172, 7
    %v174 = vsub.s32 0, %v173
    %v175 = vrot.slane %v170, %v174
    %v178 = vunpack.c.l.b16 %v141
    %v179 = vunpack.c.h.b16 %v141
    %v180 = vpack.c.b16 %v178, %v178
    %v181 = vpack.c.b16 %v179, %v179
    %v211 = vunpack.c.l.b16 %v142
    %v212 = vunpack.c.l.b16 %v143
    %v213 = vunpack.c.l.b16 %v144
    %v214 = vunpack.c.l.b16 %v145
    %v215 = vunpack.c.l.b16 %v146
    %v216 = vunpack.c.l.b16 %v147
    %v217 = vunpack.c.l.b16 %v148
    %v218 = vunpack.c.l.b16 %v149
    %v219 = vunpack.c.l.b16 %v150
    %v220 = vunpack.c.l.b16 %v151
    %v221 = vunpack.c.l.b16 %v152
    %v222 = vunpack.c.l.b16 %v153
    %v223 = vunpack.c.l.b16 %v154
    %v224 = vunpack.c.l.b16 %v155
    %v225 = vunpack.c.l.b16 %v156
    %v226 = vunpack.c.l.b16 %v157
    %v227 = vunpack.c.l.b16 %v158
    %v228 = vunpack.c.l.b16 %v159
    %v229 = vunpack.c.l.b16 %v160
    %v230 = vunpack.c.l.b16 %v161
    %v231 = vunpack.c.l.b16 %v162
    %v232 = vunpack.c.l.b16 %v163
    %v233 = vunpack.c.l.b16 %v164
    %v234 = vunpack.c.l.b16 %v165
    %v235 = vunpack.c.l.b16 %v166
    %v236 = vunpack.c.l.b16 %v167
    %v237 = vunpack.c.l.b16 %v168
    %v238 = vunpack.c.l.b16 %v169
    %v239 = vpack.c.b16 %v212, %v211
    %v240 = vpack.c.b16 %v214, %v213
    %v241 = vpack.c.b16 %v216, %v215
    %v242 = vpack.c.b16 %v218, %v217
    %v243 = vpack.c.b16 %v220, %v219
    %v244 = vpack.c.b16 %v222, %v221
    %v245 = vpack.c.b16 %v224, %v223
    %v246 = vpack.c.b16 %v226, %v225
    %v247 = vpack.c.b16 %v228, %v227
    %v248 = vpack.c.b16 %v230, %v229
    %v249 = vpack.c.b16 %v232, %v231
    %v250 = vpack.c.b16 %v234, %v233
    %v251 = vpack.c.b16 %v236, %v235
    %v252 = vpack.c.b16 %v238, %v237
    %vm267 = vcmask 785408
    %v269 = vsel %vm267, %v181, 0
    %271 = vmatprep.subr.bf16.mxu0 0
    %272 = vmatpush1.bf16.msra.mxu0 %v246
    %273 = vmatprep.subr.bf16.mxu0 0
    %274 = vmatpush1.bf16.msra.mxu0 %v245
    %275 = vmatprep.subr.bf16.mxu0 0
    %276 = vmatpush1.bf16.msra.mxu0 %v244
    %277 = vmatprep.subr.bf16.mxu0 0
    %278 = vmatpush1.bf16.msra.mxu0 %v243
    %279 = vmatprep.subr.bf16.mxu0 0
    %280 = vmatpush1.bf16.msra.mxu0 %v242
    %281 = vmatprep.subr.bf16.mxu0 0
    %282 = vmatpush1.bf16.msra.mxu0 %v241
    %283 = vmatprep.subr.bf16.mxu0 0
    %284 = vmatpush1.bf16.msra.mxu0 %v240
    %285 = vmatprep.subr.bf16.mxu0 0
    %286 = vmatpush1.bf16.msra.mxu0 %v239
    %287 = vmatprep.subr.bf16.mxu0 0
    %288 = vmatpush2.bf16.msra.mxu0 0
    %289 = vmatprep.subr.bf16.mxu0 0
    %290 = vmatpush2.bf16.msra.mxu0 0
    %291 = vmatprep.subr.bf16.mxu0 0
    %292 = vmatpush2.bf16.msra.mxu0 %v252
    %293 = vmatprep.subr.bf16.mxu0 0
    %294 = vmatpush2.bf16.msra.mxu0 %v251
    %295 = vmatprep.subr.bf16.mxu0 0
    %296 = vmatpush2.bf16.msra.mxu0 %v250
    %297 = vmatprep.subr.bf16.mxu0 0
    %298 = vmatpush2.bf16.msra.mxu0 %v249
    %299 = vmatprep.subr.bf16.mxu0 0
    %300 = vmatpush2.bf16.msra.mxu0 %v248
    %301 = vmatprep.subr.bf16.mxu0 0
    %302 = vmatpush2.bf16.msra.mxu0 %v247
    %303 = vmatprep.mubr.bf16.mxu0 %v269
    %304 = vmatmul.mubr.bf16.gmra.mxu0 %v180
    %v305 = vpop.f32.mrf.mxu0
    %v306 = vadd.f32 %v175, %v305
    %v307 = vpop.f32.mrf.mxu0
    %v308 = vpop.f32.mrf.mxu0
    %v309 = vpop.f32.mrf.mxu0
    %310 = vdwg.mxu0
    %s311 = scalar_lea.vmem [#allocation2], 112
    %v312 = vld [vmem:[%s311] sm:$0xf]
    %v313 = vld [vmem:[%s311 + $0x4] sm:$0xf]
    %v314 = vld [vmem:[%s311 + $0x8] sm:$0xf]
    %v315 = vld [vmem:[%s311 + $0xc] sm:$0xf]
    %v316 = vld [vmem:[%s311 + $0x10] sm:$0xf]
    %v317 = vld [vmem:[%s311 + $0x14] sm:$0xf]
    %v318 = vld [vmem:[%s311 + $0x18] sm:$0xf]
    %v319 = vld [vmem:[%s311 + $0x1c] sm:$0xf]
    %v320 = vld [vmem:[%s311 + $0x20] sm:$0xf]
    %v321 = vld [vmem:[%s311 + $0x24] sm:$0xf]
    %v322 = vld [vmem:[%s311 + $0x28] sm:$0xf]
    %v323 = vld [vmem:[%s311 + $0x2c] sm:$0xf]
    %v324 = vld [vmem:[%s311 + $0x30] sm:$0xf]
    %v325 = vld [vmem:[%s311 + $0x34] sm:$0xf]
    %v326 = vld [vmem:[%s311 + $0x38] sm:$0xf]
    %v327 = vld [vmem:[%s311 + $0x3c] sm:$0xf]
    %v328 = vld [vmem:[%s311 + $0x40] sm:$0xf]
    %v329 = vld [vmem:[%s311 + $0x44] sm:$0xf]
    %v330 = vld [vmem:[%s311 + $0x48] sm:$0xf]
    %v331 = vld [vmem:[%s311 + $0x4c] sm:$0xf]
    %v332 = vld [vmem:[%s311 + $0x50] sm:$0xf]
    %v333 = vld [vmem:[%s311 + $0x54] sm:$0xf]
    %v334 = vld [vmem:[%s311 + $0x58] sm:$0xf]
    %v335 = vld [vmem:[%s311 + $0x5c] sm:$0xf]
    %v336 = vld [vmem:[%s311 + $0x60] sm:$0xf]
    %v337 = vld [vmem:[%s311 + $0x64] sm:$0xf]
    %v338 = vld [vmem:[%s311 + $0x68] sm:$0xf]
    %v339 = vld [vmem:[%s311 + $0x6c] sm:$0xf]
    %s340 = scalar_lea.vmem %s3, 1
    %v341 = vld [vmem:[%s340] sm:$0x1]
    %v343 = vlaneseq
    %v344 = vshrl.u32 %v343, 7
    %v345 = vsub.s32 0, %v344
    %v346 = vrot.slane %v341, %v345
    %v376 = vunpack.c.l.b16 %v312
    %v377 = vunpack.c.l.b16 %v313
    %v378 = vunpack.c.l.b16 %v314
    %v379 = vunpack.c.l.b16 %v315
    %v380 = vunpack.c.l.b16 %v316
    %v381 = vunpack.c.l.b16 %v317
    %v382 = vunpack.c.l.b16 %v318
    %v383 = vunpack.c.l.b16 %v319
    %v384 = vunpack.c.l.b16 %v320
    %v385 = vunpack.c.l.b16 %v321
    %v386 = vunpack.c.l.b16 %v322
    %v387 = vunpack.c.l.b16 %v323
    %v388 = vunpack.c.l.b16 %v324
    %v389 = vunpack.c.l.b16 %v325
    %v390 = vunpack.c.l.b16 %v326
    %v391 = vunpack.c.l.b16 %v327
    %v392 = vunpack.c.l.b16 %v328
    %v393 = vunpack.c.l.b16 %v329
    %v394 = vunpack.c.l.b16 %v330
    %v395 = vunpack.c.l.b16 %v331
    %v396 = vunpack.c.l.b16 %v332
    %v397 = vunpack.c.l.b16 %v333
    %v398 = vunpack.c.l.b16 %v334
    %v399 = vunpack.c.l.b16 %v335
    %v400 = vunpack.c.l.b16 %v336
    %v401 = vunpack.c.l.b16 %v337
    %v402 = vunpack.c.l.b16 %v338
    %v403 = vunpack.c.l.b16 %v339
    %v404 = vpack.c.b16 %v377, %v376
    %v405 = vpack.c.b16 %v379, %v378
    %v406 = vpack.c.b16 %v381, %v380
    %v407 = vpack.c.b16 %v383, %v382
    %v408 = vpack.c.b16 %v385, %v384
    %v409 = vpack.c.b16 %v387, %v386
    %v410 = vpack.c.b16 %v389, %v388
    %v411 = vpack.c.b16 %v391, %v390
    %v412 = vpack.c.b16 %v393, %v392
    %v413 = vpack.c.b16 %v395, %v394
    %v414 = vpack.c.b16 %v397, %v396
    %v415 = vpack.c.b16 %v399, %v398
    %v416 = vpack.c.b16 %v401, %v400
    %v417 = vpack.c.b16 %v403, %v402
    %432 = vmatprep.subr.bf16.mxu0 0
    %433 = vmatpush1.bf16.msra.mxu0 %v411
    %434 = vmatprep.subr.bf16.mxu0 0
    %435 = vmatpush1.bf16.msra.mxu0 %v410
    %436 = vmatprep.subr.bf16.mxu0 0
    %437 = vmatpush1.bf16.msra.mxu0 %v409
    %438 = vmatprep.subr.bf16.mxu0 0
    %439 = vmatpush1.bf16.msra.mxu0 %v408
    %440 = vmatprep.subr.bf16.mxu0 0
    %441 = vmatpush1.bf16.msra.mxu0 %v407
    %442 = vmatprep.subr.bf16.mxu0 0
    %443 = vmatpush1.bf16.msra.mxu0 %v406
    %444 = vmatprep.subr.bf16.mxu0 0
    %445 = vmatpush1.bf16.msra.mxu0 %v405
    %446 = vmatprep.subr.bf16.mxu0 0
    %447 = vmatpush1.bf16.msra.mxu0 %v404
    %448 = vmatprep.subr.bf16.mxu0 0
    %449 = vmatpush2.bf16.msra.mxu0 0
    %450 = vmatprep.subr.bf16.mxu0 0
    %451 = vmatpush2.bf16.msra.mxu0 0
    %452 = vmatprep.subr.bf16.mxu0 0
    %453 = vmatpush2.bf16.msra.mxu0 %v417
    %454 = vmatprep.subr.bf16.mxu0 0
    %455 = vmatpush2.bf16.msra.mxu0 %v416
    %456 = vmatprep.subr.bf16.mxu0 0
    %457 = vmatpush2.bf16.msra.mxu0 %v415
    %458 = vmatprep.subr.bf16.mxu0 0
    %459 = vmatpush2.bf16.msra.mxu0 %v414
    %460 = vmatprep.subr.bf16.mxu0 0
    %461 = vmatpush2.bf16.msra.mxu0 %v413
    %462 = vmatprep.subr.bf16.mxu0 0
    %463 = vmatpush2.bf16.msra.mxu0 %v412
    %464 = vmatprep.mubr.bf16.mxu0 %v269
    %465 = vmatmul.mubr.bf16.gmra.mxu0 %v180
    %v466 = vpop.f32.mrf.mxu0
    %v467 = vadd.f32 %v346, %v466
    %v468 = vpop.f32.mrf.mxu0
    %v469 = vpop.f32.mrf.mxu0
    %v470 = vpop.f32.mrf.mxu0
    %471 = vdwg.mxu0
    %s472 = scalar_lea.vmem [#allocation2], 224
    %v473 = vld [vmem:[%s472] sm:$0xf]
    %v474 = vld [vmem:[%s472 + $0x4] sm:$0xf]
    %v475 = vld [vmem:[%s472 + $0x8] sm:$0xf]
    %v476 = vld [vmem:[%s472 + $0xc] sm:$0xf]
    %v477 = vld [vmem:[%s472 + $0x10] sm:$0xf]
    %v478 = vld [vmem:[%s472 + $0x14] sm:$0xf]
    %v479 = vld [vmem:[%s472 + $0x18] sm:$0xf]
    %v480 = vld [vmem:[%s472 + $0x1c] sm:$0xf]
    %v481 = vld [vmem:[%s472 + $0x20] sm:$0xf]
    %v482 = vld [vmem:[%s472 + $0x24] sm:$0xf]
    %v483 = vld [vmem:[%s472 + $0x28] sm:$0xf]
    %v484 = vld [vmem:[%s472 + $0x2c] sm:$0xf]
    %v485 = vld [vmem:[%s472 + $0x30] sm:$0xf]
    %v486 = vld [vmem:[%s472 + $0x34] sm:$0xf]
    %v487 = vld [vmem:[%s472 + $0x38] sm:$0xf]
    %v488 = vld [vmem:[%s472 + $0x3c] sm:$0xf]
    %v489 = vld [vmem:[%s472 + $0x40] sm:$0xf]
    %v490 = vld [vmem:[%s472 + $0x44] sm:$0xf]
    %v491 = vld [vmem:[%s472 + $0x48] sm:$0xf]
    %v492 = vld [vmem:[%s472 + $0x4c] sm:$0xf]
    %v493 = vld [vmem:[%s472 + $0x50] sm:$0xf]
    %v494 = vld [vmem:[%s472 + $0x54] sm:$0xf]
    %v495 = vld [vmem:[%s472 + $0x58] sm:$0xf]
    %v496 = vld [vmem:[%s472 + $0x5c] sm:$0xf]
    %v497 = vld [vmem:[%s472 + $0x60] sm:$0xf]
    %v498 = vld [vmem:[%s472 + $0x64] sm:$0xf]
    %v499 = vld [vmem:[%s472 + $0x68] sm:$0xf]
    %v500 = vld [vmem:[%s472 + $0x6c] sm:$0xf]
    %s501 = scalar_lea.vmem %s3, 2
    %v502 = vld [vmem:[%s501] sm:$0x1]
    %v504 = vlaneseq
    %v505 = vshrl.u32 %v504, 7
    %v506 = vsub.s32 0, %v505
    %v507 = vrot.slane %v502, %v506
    %v537 = vunpack.c.l.b16 %v473
    %v538 = vunpack.c.l.b16 %v474
    %v539 = vunpack.c.l.b16 %v475
    %v540 = vunpack.c.l.b16 %v476
    %v541 = vunpack.c.l.b16 %v477
    %v542 = vunpack.c.l.b16 %v478
    %v543 = vunpack.c.l.b16 %v479
    %v544 = vunpack.c.l.b16 %v480
    %v545 = vunpack.c.l.b16 %v481
    %v546 = vunpack.c.l.b16 %v482
    %v547 = vunpack.c.l.b16 %v483
    %v548 = vunpack.c.l.b16 %v484
    %v549 = vunpack.c.l.b16 %v485
    %v550 = vunpack.c.l.b16 %v486
    %v551 = vunpack.c.l.b16 %v487
    %v552 = vunpack.c.l.b16 %v488
    %v553 = vunpack.c.l.b16 %v489
    %v554 = vunpack.c.l.b16 %v490
    %v555 = vunpack.c.l.b16 %v491
    %v556 = vunpack.c.l.b16 %v492
    %v557 = vunpack.c.l.b16 %v493
    %v558 = vunpack.c.l.b16 %v494
    %v559 = vunpack.c.l.b16 %v495
    %v560 = vunpack.c.l.b16 %v496
    %v561 = vunpack.c.l.b16 %v497
    %v562 = vunpack.c.l.b16 %v498
    %v563 = vunpack.c.l.b16 %v499
    %v564 = vunpack.c.l.b16 %v500
    %v565 = vpack.c.b16 %v538, %v537
    %v566 = vpack.c.b16 %v540, %v539
    %v567 = vpack.c.b16 %v542, %v541
    %v568 = vpack.c.b16 %v544, %v543
    %v569 = vpack.c.b16 %v546, %v545
    %v570 = vpack.c.b16 %v548, %v547
    %v571 = vpack.c.b16 %v550, %v549
    %v572 = vpack.c.b16 %v552, %v551
    %v573 = vpack.c.b16 %v554, %v553
    %v574 = vpack.c.b16 %v556, %v555
    %v575 = vpack.c.b16 %v558, %v557
    %v576 = vpack.c.b16 %v560, %v559
    %v577 = vpack.c.b16 %v562, %v561
    %v578 = vpack.c.b16 %v564, %v563
    %593 = vmatprep.subr.bf16.mxu0 0
    %594 = vmatpush1.bf16.msra.mxu0 %v572
    %595 = vmatprep.subr.bf16.mxu0 0
    %596 = vmatpush1.bf16.msra.mxu0 %v571
    %597 = vmatprep.subr.bf16.mxu0 0
    %598 = vmatpush1.bf16.msra.mxu0 %v570
    %599 = vmatprep.subr.bf16.mxu0 0
    %600 = vmatpush1.bf16.msra.mxu0 %v569
    %601 = vmatprep.subr.bf16.mxu0 0
    %602 = vmatpush1.bf16.msra.mxu0 %v568
    %603 = vmatprep.subr.bf16.mxu0 0
    %604 = vmatpush1.bf16.msra.mxu0 %v567
    %605 = vmatprep.subr.bf16.mxu0 0
    %606 = vmatpush1.bf16.msra.mxu0 %v566
    %607 = vmatprep.subr.bf16.mxu0 0
    %608 = vmatpush1.bf16.msra.mxu0 %v565
    %609 = vmatprep.subr.bf16.mxu0 0
    %610 = vmatpush2.bf16.msra.mxu0 0
    %611 = vmatprep.subr.bf16.mxu0 0
    %612 = vmatpush2.bf16.msra.mxu0 0
    %613 = vmatprep.subr.bf16.mxu0 0
    %614 = vmatpush2.bf16.msra.mxu0 %v578
    %615 = vmatprep.subr.bf16.mxu0 0
    %616 = vmatpush2.bf16.msra.mxu0 %v577
    %617 = vmatprep.subr.bf16.mxu0 0
    %618 = vmatpush2.bf16.msra.mxu0 %v576
    %619 = vmatprep.subr.bf16.mxu0 0
    %620 = vmatpush2.bf16.msra.mxu0 %v575
    %621 = vmatprep.subr.bf16.mxu0 0
    %622 = vmatpush2.bf16.msra.mxu0 %v574
    %623 = vmatprep.subr.bf16.mxu0 0
    %624 = vmatpush2.bf16.msra.mxu0 %v573
    %625 = vmatprep.mubr.bf16.mxu0 %v269
    %626 = vmatmul.mubr.bf16.gmra.mxu0 %v180
    %v627 = vpop.f32.mrf.mxu0
    %v628 = vadd.f32 %v507, %v627
    %v629 = vpop.f32.mrf.mxu0
    %v630 = vpop.f32.mrf.mxu0
    %v631 = vpop.f32.mrf.mxu0
    %632 = vdwg.mxu0
    %v633 = vmul.f32 %v123, %v306
    %v634 = vmul.f32 %v128, %v467
    %v635 = vadd.f32 %v633, %v634
    %v636 = vmul.f32 %v133, %v628
    %v637 = vadd.f32 %v635, %v636
    %v638 = vadd.f32 %v637, %v138
    %639 = vst [vmem:[#allocation5] sm:$0xff] %v638
    // Predicated region
    $region26: #{tpu_custom_call.1} parent=1 // pred_check
      _
    $region27: #{tpu_custom_call.1} parent=1 // pred_check_branch
      %641 = sbr.rel (0) target = $region29
    $region28: #{tpu_custom_call.1} parent=1 // pred_region
      %s643 = ssub.s32 128, 128
      %644 = vsyncadd [#allocation4], %s643
      %s646 = sshll.u32 [#allocation5], 4
      %s647 = int_to_ptr.vmem [resolvable:$true] %s646
      %649 = dma.vmem_to_hbm [thread:$0]  %s647, 128, %s5, [#allocation4]
    $region29: #{tpu_custom_call.1} parent=1 // pred_fallthru
      _
    // Predicated region
    $region30: #{tpu_custom_call.1} parent=1 // pred_check
      _
    $region31: #{tpu_custom_call.1} parent=1 // pred_check_branch
      %651 = sbr.rel (0) target = $region33
    $region32: #{tpu_custom_call.1} parent=1 // pred_region
      %652 = dma.done [#allocation4], 128
    $region33: #{tpu_custom_call.1} parent=1 // pred_fallthru
      _
    %653 = vsyncpa [#allocation3], 1
    %654 = vsyncpa [#allocation4], 1

</llo_original>
